<compile_context>
chip_gen: v5e
topology: v5e:2x2
jax: 0.10.0
libtpu: 0.0.40
codegen_flags: <defaults>
</compile_context>

<pallas_src>
import functools

import jax
import jax.numpy as jnp
from jax import lax
from jax.experimental import pallas as pl
from jax.experimental.pallas import tpu as pltpu


def _round_up(x, m):
    return ((x + m - 1) // m) * m


# -----------------------------------------------------------------------------
# Fused SwiGLU kernel: one (tm, K) row-block of x -> one (tm, O) row-block out
# -----------------------------------------------------------------------------
def _swiglu_kernel(x_ref, w1_ref, b1_ref, w2_ref, b2_ref,
                   gamma_ref, beta_ref, w3_ref, b3_ref, o_ref, *, eps):
    x = x_ref[...].astype(jnp.float32)                            # (tm, K)

    # Gate / value projections on the MXU, f32 accumulation.
    x1 = jnp.dot(x, w1_ref[...], preferred_element_type=jnp.float32) + b1_ref[...]
    x2 = jnp.dot(x, w2_ref[...], preferred_element_type=jnp.float32) + b2_ref[...]

    # SiLU(x1) * x2   (sigmoid -> EUP, mul -> VPU)
    h = (x1 * jax.nn.sigmoid(x1)) * x2                            # (tm, H)

    # LayerNorm over the hidden dim (ffn_ln, subln=True).
    mean = jnp.mean(h, axis=-1, keepdims=True)
    hc = h - mean
    var = jnp.mean(hc * hc, axis=-1, keepdims=True)
    hn = hc * lax.rsqrt(var + eps)
    hn = hn * gamma_ref[...] + beta_ref[...]

    # Output projection.
    out = jnp.dot(hn, w3_ref[...], preferred_element_type=jnp.float32) + b3_ref[...]
    o_ref[...] = out.astype(o_ref.dtype)


# -----------------------------------------------------------------------------
# Wrapper: layout plumbing + pallas_call
# -----------------------------------------------------------------------------
def swiglu_forward(x, w1, b1, w2, b2, ln_gamma, ln_beta, w3, b3,
                   *, eps=1e-5, block_m=256):
    """x: (..., K). Weights are PyTorch-layout: w1/w2 (H, K), w3 (O, H)."""
    orig_shape = x.shape
    K = x.shape[-1]
    H = w1.shape[0]
    O = w3.shape[0]

    xm = x.reshape(-1, K)
    M = xm.shape[0]

    # Row-block size: large blocks amortize per-step pipeline overhead;
    # sublane axis must be a multiple of 8.
    tm = min(block_m, _round_up(M, 8))
    Mp = _round_up(M, tm)
    if Mp != M:
        xm = jnp.pad(xm, ((0, Mp - M), (0, 0)))

    # Keep all parameter math in f32; transpose to (in, out) for x @ W.
    f32 = jnp.float32
    w1t = w1.T.astype(f32)                     # (K, H)
    w2t = w2.T.astype(f32)                     # (K, H)
    w3t = w3.T.astype(f32)                     # (H, O)
    b1r = b1.reshape(1, H).astype(f32)
    b2r = b2.reshape(1, H).astype(f32)
    g_r = ln_gamma.reshape(1, H).astype(f32)
    be_r = ln_beta.reshape(1, H).astype(f32)
    b3r = b3.reshape(1, O).astype(f32)

    grid = (Mp // tm,)
    const = lambda i: (0, 0)                   # resident parameter blocks

    out = pl.pallas_call(
        functools.partial(_swiglu_kernel, eps=eps),
        out_shape=jax.ShapeDtypeStruct((Mp, O), x.dtype),
        grid_spec=pltpu.PrefetchScalarGridSpec(
            num_scalar_prefetch=0,
            grid=grid,
            in_specs=[
                pl.BlockSpec((tm, K), lambda i: (i, 0)),   # x row-block
                pl.BlockSpec((K, H), const),               # w1^T
                pl.BlockSpec((1, H), const),               # b1
                pl.BlockSpec((K, H), const),               # w2^T
                pl.BlockSpec((1, H), const),               # b2
                pl.BlockSpec((1, H), const),               # ln gamma
                pl.BlockSpec((1, H), const),               # ln beta
                pl.BlockSpec((H, O), const),               # w3^T
                pl.BlockSpec((1, O), const),               # b3
            ],
            out_specs=pl.BlockSpec((tm, O), lambda i: (i, 0)),
        ),
        compiler_params=pltpu.CompilerParams(
            dimension_semantics=("parallel",)),
    )(xm, w1t, b1r, w2t, b2r, g_r, be_r, w3t, b3r)

    if Mp != M:
        out = out[:M]
    return out.reshape(*orig_shape[:-1], O)


# -----------------------------------------------------------------------------
# Pure-JAX reference (verification only)
# -----------------------------------------------------------------------------
def _swiglu_ref(x, w1, b1, w2, b2, g, be, w3, b3, eps=1e-5):
    x1 = x @ w1.T + b1
    x2 = x @ w2.T + b2
    h = jax.nn.silu(x1) * x2
    mean = jnp.mean(h, axis=-1, keepdims=True)
    var = jnp.mean((h - mean) ** 2, axis=-1, keepdims=True)
    hn = (h - mean) * lax.rsqrt(var + eps) * g + be
    return hn @ w3.T + b3


if __name__ == "__main__":
    # Small shapes consistent with the module:
    # batch=2, seq=8, in_features=32, hidden_features=64, out_features=32
    batch, seq = 2, 8
    in_features, hidden_features, out_features = 32, 64, 32

    key = jax.random.PRNGKey(0)
    ks = jax.random.split(key, 8)
    x = jax.random.normal(ks[0], (batch, seq, in_features), dtype=jnp.float32)
    w1 = jax.random.normal(ks[1], (hidden_features, in_features), jnp.float32) / jnp.sqrt(in_features)
    b1 = jax.random.normal(ks[2], (hidden_features,), jnp.float32) * 0.02
    w2 = jax.random.normal(ks[3], (hidden_features, in_features), jnp.float32) / jnp.sqrt(in_features)
    b2 = jax.random.normal(ks[4], (hidden_features,), jnp.float32) * 0.02
    ln_gamma = 1.0 + 0.1 * jax.random.normal(ks[5], (hidden_features,), jnp.float32)
    ln_beta = 0.1 * jax.random.normal(ks[6], (hidden_features,), jnp.float32)
    w3 = jax.random.normal(ks[7], (out_features, hidden_features), jnp.float32) / jnp.sqrt(hidden_features)
    b3 = jnp.zeros((out_features,), jnp.float32)

    out = swiglu_forward(x, w1, b1, w2, b2, ln_gamma, ln_beta, w3, b3)
    out = jax.block_until_ready(out)

    ref = _swiglu_ref(x, w1, b1, w2, b2, ln_gamma, ln_beta, w3, b3)
    assert out.shape == (batch, seq, out_features) and out.dtype == x.dtype
    assert jnp.allclose(out, ref, atol=1e-4, rtol=1e-4), "mismatch vs reference"

    print("KERNEL_OK")
</pallas_src>

<mosaic_0001>
module attributes {stable_mosaic.version = 11 : i64} {
  func.func @_swiglu_kernel(%arg0: i32, %arg1: memref<16x32xf32, #tpu.memory_space<vmem>>, %arg2: memref<32x64xf32, #tpu.memory_space<vmem>>, %arg3: memref<1x64xf32, #tpu.memory_space<vmem>>, %arg4: memref<32x64xf32, #tpu.memory_space<vmem>>, %arg5: memref<1x64xf32, #tpu.memory_space<vmem>>, %arg6: memref<1x64xf32, #tpu.memory_space<vmem>>, %arg7: memref<1x64xf32, #tpu.memory_space<vmem>>, %arg8: memref<64x32xf32, #tpu.memory_space<vmem>>, %arg9: memref<1x32xf32, #tpu.memory_space<vmem>>, %arg10: memref<16x32xf32, #tpu.memory_space<vmem>>) attributes {dimension_semantics = [#tpu.dimension_semantics<parallel>], iteration_bounds = array<i64: 1>, scalar_prefetch = 0 : i64, scratch_operands = 0 : i64, tpu.core_type = #tpu.core_type<tc>, window_params = [{transform_indices = @transform_0, window_bounds = array<i64: 16, 32>}, {pipeline_mode = #tpu.pipeline_mode<synchronous>, transform_indices = @transform_1, window_bounds = array<i64: 32, 64>}, {pipeline_mode = #tpu.pipeline_mode<synchronous>, transform_indices = @transform_2, window_bounds = array<i64: 1, 64>}, {pipeline_mode = #tpu.pipeline_mode<synchronous>, transform_indices = @transform_3, window_bounds = array<i64: 32, 64>}, {pipeline_mode = #tpu.pipeline_mode<synchronous>, transform_indices = @transform_4, window_bounds = array<i64: 1, 64>}, {pipeline_mode = #tpu.pipeline_mode<synchronous>, transform_indices = @transform_5, window_bounds = array<i64: 1, 64>}, {pipeline_mode = #tpu.pipeline_mode<synchronous>, transform_indices = @transform_6, window_bounds = array<i64: 1, 64>}, {pipeline_mode = #tpu.pipeline_mode<synchronous>, transform_indices = @transform_7, window_bounds = array<i64: 64, 32>}, {pipeline_mode = #tpu.pipeline_mode<synchronous>, transform_indices = @transform_8, window_bounds = array<i64: 1, 32>}, {transform_indices = @transform_9, window_bounds = array<i64: 16, 32>}]} {
    %c0 = arith.constant 0 : index
    %c0_0 = arith.constant 0 : index
    %0 = vector.load %arg1[%c0, %c0_0] : memref<16x32xf32, #tpu.memory_space<vmem>>, vector<16x32xf32>
    %c0_1 = arith.constant 0 : index
    %c0_2 = arith.constant 0 : index
    %1 = vector.load %arg2[%c0_1, %c0_2] : memref<32x64xf32, #tpu.memory_space<vmem>>, vector<32x64xf32>
    %cst = arith.constant dense<0.000000e+00> : vector<16x64xf32>
    %2 = tpu.matmul %0, %1, %cst {dimension_numbers = #tpu.dot_dimension_numbers<[1], [0], [0], [1], [0, 0, 1, 1], [], []>} : vector<16x32xf32>, vector<32x64xf32>, vector<16x64xf32> -> vector<16x64xf32>
    %c0_3 = arith.constant 0 : index
    %c0_4 = arith.constant 0 : index
    %3 = vector.load %arg3[%c0_3, %c0_4] : memref<1x64xf32, #tpu.memory_space<vmem>>, vector<1x64xf32>
    %4 = vector.broadcast %3 : vector<1x64xf32> to vector<16x64xf32>
    %5 = arith.addf %2, %4 : vector<16x64xf32>
    %c0_5 = arith.constant 0 : index
    %c0_6 = arith.constant 0 : index
    %6 = vector.load %arg4[%c0_5, %c0_6] : memref<32x64xf32, #tpu.memory_space<vmem>>, vector<32x64xf32>
    %cst_7 = arith.constant dense<0.000000e+00> : vector<16x64xf32>
    %7 = tpu.matmul %0, %6, %cst_7 {dimension_numbers = #tpu.dot_dimension_numbers<[1], [0], [0], [1], [0, 0, 1, 1], [], []>} : vector<16x32xf32>, vector<32x64xf32>, vector<16x64xf32> -> vector<16x64xf32>
    %c0_8 = arith.constant 0 : index
    %c0_9 = arith.constant 0 : index
    %8 = vector.load %arg5[%c0_8, %c0_9] : memref<1x64xf32, #tpu.memory_space<vmem>>, vector<1x64xf32>
    %9 = vector.broadcast %8 : vector<1x64xf32> to vector<16x64xf32>
    %10 = arith.addf %7, %9 : vector<16x64xf32>
    %11 = arith.negf %5 : vector<16x64xf32>
    %12 = math.exp %11 : vector<16x64xf32>
    %cst_10 = arith.constant 1.000000e+00 : f32
    %13 = vector.broadcast %cst_10 : f32 to vector<16x64xf32>
    %14 = arith.addf %13, %12 : vector<16x64xf32>
    %15 = arith.divf %13, %14 : vector<16x64xf32>
    %16 = arith.mulf %5, %15 : vector<16x64xf32>
    %17 = arith.mulf %16, %10 : vector<16x64xf32>
    %cst_11 = arith.constant dense<0.000000e+00> : vector<16xf32>
    %18 = vector.multi_reduction <add>, %17, %cst_11 [1] : vector<16x64xf32> to vector<16xf32>
    %19 = vector.shape_cast %18 : vector<16xf32> to vector<16x1xf32>
    %cst_12 = arith.constant 6.400000e+01 : f32
    %20 = vector.broadcast %cst_12 : f32 to vector<16x1xf32>
    %21 = arith.divf %19, %20 : vector<16x1xf32>
    %22 = vector.broadcast %21 : vector<16x1xf32> to vector<16x64xf32>
    %23 = arith.subf %17, %22 : vector<16x64xf32>
    %24 = arith.mulf %23, %23 : vector<16x64xf32>
    %cst_13 = arith.constant dense<0.000000e+00> : vector<16xf32>
    %25 = vector.multi_reduction <add>, %24, %cst_13 [1] : vector<16x64xf32> to vector<16xf32>
    %26 = vector.shape_cast %25 : vector<16xf32> to vector<16x1xf32>
    %cst_14 = arith.constant 6.400000e+01 : f32
    %27 = vector.broadcast %cst_14 : f32 to vector<16x1xf32>
    %28 = arith.divf %26, %27 : vector<16x1xf32>
    %cst_15 = arith.constant 9.99999974E-6 : f32
    %29 = vector.broadcast %cst_15 : f32 to vector<16x1xf32>
    %30 = arith.addf %28, %29 : vector<16x1xf32>
    %31 = math.rsqrt %30 : vector<16x1xf32>
    %32 = vector.broadcast %31 : vector<16x1xf32> to vector<16x64xf32>
    %33 = arith.mulf %23, %32 : vector<16x64xf32>
    %c0_16 = arith.constant 0 : index
    %c0_17 = arith.constant 0 : index
    %34 = vector.load %arg6[%c0_16, %c0_17] : memref<1x64xf32, #tpu.memory_space<vmem>>, vector<1x64xf32>
    %35 = vector.broadcast %34 : vector<1x64xf32> to vector<16x64xf32>
    %36 = arith.mulf %33, %35 : vector<16x64xf32>
    %c0_18 = arith.constant 0 : index
    %c0_19 = arith.constant 0 : index
    %37 = vector.load %arg7[%c0_18, %c0_19] : memref<1x64xf32, #tpu.memory_space<vmem>>, vector<1x64xf32>
    %38 = vector.broadcast %37 : vector<1x64xf32> to vector<16x64xf32>
    %39 = arith.addf %36, %38 : vector<16x64xf32>
    %c0_20 = arith.constant 0 : index
    %c0_21 = arith.constant 0 : index
    %40 = vector.load %arg8[%c0_20, %c0_21] : memref<64x32xf32, #tpu.memory_space<vmem>>, vector<64x32xf32>
    %cst_22 = arith.constant dense<0.000000e+00> : vector<16x32xf32>
    %41 = tpu.matmul %39, %40, %cst_22 {dimension_numbers = #tpu.dot_dimension_numbers<[1], [0], [0], [1], [0, 0, 1, 1], [], []>} : vector<16x64xf32>, vector<64x32xf32>, vector<16x32xf32> -> vector<16x32xf32>
    %c0_23 = arith.constant 0 : index
    %c0_24 = arith.constant 0 : index
    %42 = vector.load %arg9[%c0_23, %c0_24] : memref<1x32xf32, #tpu.memory_space<vmem>>, vector<1x32xf32>
    %43 = vector.broadcast %42 : vector<1x32xf32> to vector<16x32xf32>
    %44 = arith.addf %41, %43 : vector<16x32xf32>
    %c0_25 = arith.constant 0 : index
    %c0_26 = arith.constant 0 : index
    %45 = vector.load %arg10[%c0_25, %c0_26] : memref<16x32xf32, #tpu.memory_space<vmem>>, vector<16x32xf32>
    tpu.vector_store %arg10[%c0_25, %c0_26], %44 {strides = array<i32>} : memref<16x32xf32, #tpu.memory_space<vmem>>, vector<16x32xf32>,
    return
  }
  func.func @transform_0(%arg0: i32) -> (i32, i32) {
    %c0_i32 = arith.constant 0 : i32
    %c0_i32_0 = arith.constant 0 : i32
    return %arg0, %c0_i32 : i32, i32
  }
  func.func @transform_1(%arg0: i32) -> (i32, i32) {
    %c0_i32 = arith.constant 0 : i32
    %c0_i32_0 = arith.constant 0 : i32
    %c0_i32_1 = arith.constant 0 : i32
    return %c0_i32, %c0_i32_0 : i32, i32
  }
  func.func @transform_2(%arg0: i32) -> (i32, i32) {
    %c0_i32 = arith.constant 0 : i32
    %c0_i32_0 = arith.constant 0 : i32
    %c0_i32_1 = arith.constant 0 : i32
    return %c0_i32, %c0_i32_0 : i32, i32
  }
  func.func @transform_3(%arg0: i32) -> (i32, i32) {
    %c0_i32 = arith.constant 0 : i32
    %c0_i32_0 = arith.constant 0 : i32
    %c0_i32_1 = arith.constant 0 : i32
    return %c0_i32, %c0_i32_0 : i32, i32
  }
  func.func @transform_4(%arg0: i32) -> (i32, i32) {
    %c0_i32 = arith.constant 0 : i32
    %c0_i32_0 = arith.constant 0 : i32
    %c0_i32_1 = arith.constant 0 : i32
    return %c0_i32, %c0_i32_0 : i32, i32
  }
  func.func @transform_5(%arg0: i32) -> (i32, i32) {
    %c0_i32 = arith.constant 0 : i32
    %c0_i32_0 = arith.constant 0 : i32
    %c0_i32_1 = arith.constant 0 : i32
    return %c0_i32, %c0_i32_0 : i32, i32
  }
  func.func @transform_6(%arg0: i32) -> (i32, i32) {
    %c0_i32 = arith.constant 0 : i32
    %c0_i32_0 = arith.constant 0 : i32
    %c0_i32_1 = arith.constant 0 : i32
    return %c0_i32, %c0_i32_0 : i32, i32
  }
  func.func @transform_7(%arg0: i32) -> (i32, i32) {
    %c0_i32 = arith.constant 0 : i32
    %c0_i32_0 = arith.constant 0 : i32
    %c0_i32_1 = arith.constant 0 : i32
    return %c0_i32, %c0_i32_0 : i32, i32
  }
  func.func @transform_8(%arg0: i32) -> (i32, i32) {
    %c0_i32 = arith.constant 0 : i32
    %c0_i32_0 = arith.constant 0 : i32
    %c0_i32_1 = arith.constant 0 : i32
    return %c0_i32, %c0_i32_0 : i32, i32
  }
  func.func @transform_9(%arg0: i32) -> (i32, i32) {
    %c0_i32 = arith.constant 0 : i32
    %c0_i32_0 = arith.constant 0 : i32
    return %arg0, %c0_i32 : i32, i32
  }
}

</mosaic_0001>

<llo_original>
// kernel: tpu_custom_call.1
$region0: #{tpu_custom_call.1}
  #allocation0 [shape = 'u32[]', space=smem, size = 0x4, offset = 0x4, fixed_abs, tag = 'smem constant byte address 0x4 - core index']
  #allocation1 [shape = 'u32[72,128]{1,0:T(1,128)}', space=vmem, size = 0x9000, scoped, tag = 'internal scratch']
  %s0 = inlined_call_operand.vmem [shape: f32[16,32], index: 0, kind: input, shape index: {}]
  %s1 = inlined_call_operand.vmem [shape: f32[32,64], index: 1, kind: input, shape index: {}]
  %s2 = inlined_call_operand.vmem [shape: f32[1,64], index: 2, kind: input, shape index: {}]
  %s3 = inlined_call_operand.vmem [shape: f32[32,64], index: 3, kind: input, shape index: {}]
  %s4 = inlined_call_operand.vmem [shape: f32[1,64], index: 4, kind: input, shape index: {}]
  %s5 = inlined_call_operand.vmem [shape: f32[1,64], index: 5, kind: input, shape index: {}]
  %s6 = inlined_call_operand.vmem [shape: f32[1,64], index: 6, kind: input, shape index: {}]
  %s7 = inlined_call_operand.vmem [shape: f32[64,32], index: 7, kind: input, shape index: {}]
  %s8 = inlined_call_operand.vmem [shape: f32[1,32], index: 8, kind: input, shape index: {}]
  %s9 = inlined_call_operand.hbm [shape: f32[16,32], index: 9, kind: output, shape index: {}]
  %s10 = sld [smem:[#allocation0]]
  $region46: #{tpu_custom_call.1} parent=0
    _
  %s12 = ssub.s32 1, %s10
  %s13 = scalar_select 0, %s12, %s10
  $region1: #{tpu_custom_call.1} parent=0
    #allocation2 [shape = 'u8[8192]{0}', space=vmem, size = 0x2000, scoped, tag = 'output window, operand 0, single buffered']
    #allocation3 [shape = 's32[1]{0}', space=sflag, size = 0x4, scoped, tag = 'scoped memory for tpu_custom_call.1']
    %14 = vsyncpa [#allocation3], 0
    // Predicated region
    $region2: #{tpu_custom_call.1} parent=1 // pred_check
      _
    $region3: #{tpu_custom_call.1} parent=1 // pred_check_branch
      %16 = sbr.rel (0) target = $region5
    $region4: #{tpu_custom_call.1} parent=1 // pred_region
      _
    $region5: #{tpu_custom_call.1} parent=1 // pred_fallthru
      _
    // Predicated region
    $region6: #{tpu_custom_call.1} parent=1 // pred_check
      _
    $region7: #{tpu_custom_call.1} parent=1 // pred_check_branch
      %18 = sbr.rel (0) target = $region9
    $region8: #{tpu_custom_call.1} parent=1 // pred_region
      _
    $region9: #{tpu_custom_call.1} parent=1 // pred_fallthru
      _
    // Predicated region
    $region10: #{tpu_custom_call.1} parent=1 // pred_check
      _
    $region11: #{tpu_custom_call.1} parent=1 // pred_check_branch
      %20 = sbr.rel (0) target = $region13
    $region12: #{tpu_custom_call.1} parent=1 // pred_region
      _
    $region13: #{tpu_custom_call.1} parent=1 // pred_fallthru
      _
    // Predicated region
    $region14: #{tpu_custom_call.1} parent=1 // pred_check
      _
    $region15: #{tpu_custom_call.1} parent=1 // pred_check_branch
      %22 = sbr.rel (0) target = $region17
    $region16: #{tpu_custom_call.1} parent=1 // pred_region
      _
    $region17: #{tpu_custom_call.1} parent=1 // pred_fallthru
      _
    // Predicated region
    $region18: #{tpu_custom_call.1} parent=1 // pred_check
      _
    $region19: #{tpu_custom_call.1} parent=1 // pred_check_branch
      %24 = sbr.rel (0) target = $region21
    $region20: #{tpu_custom_call.1} parent=1 // pred_region
      _
    $region21: #{tpu_custom_call.1} parent=1 // pred_fallthru
      _
    // Predicated region
    $region22: #{tpu_custom_call.1} parent=1 // pred_check
      _
    $region23: #{tpu_custom_call.1} parent=1 // pred_check_branch
      %26 = sbr.rel (0) target = $region25
    $region24: #{tpu_custom_call.1} parent=1 // pred_region
      _
    $region25: #{tpu_custom_call.1} parent=1 // pred_fallthru
      _
    // Predicated region
    $region26: #{tpu_custom_call.1} parent=1 // pred_check
      _
    $region27: #{tpu_custom_call.1} parent=1 // pred_check_branch
      %28 = sbr.rel (0) target = $region29
    $region28: #{tpu_custom_call.1} parent=1 // pred_region
      _
    $region29: #{tpu_custom_call.1} parent=1 // pred_fallthru
      _
    // Predicated region
    $region30: #{tpu_custom_call.1} parent=1 // pred_check
      _
    $region31: #{tpu_custom_call.1} parent=1 // pred_check_branch
      %30 = sbr.rel (0) target = $region33
    $region32: #{tpu_custom_call.1} parent=1 // pred_region
      _
    $region33: #{tpu_custom_call.1} parent=1 // pred_fallthru
      _
    // Predicated region
    $region34: #{tpu_custom_call.1} parent=1 // pred_check
      _
    $region35: #{tpu_custom_call.1} parent=1 // pred_check_branch
      %32 = sbr.rel (0) target = $region37
    $region36: #{tpu_custom_call.1} parent=1 // pred_region
      _
    $region37: #{tpu_custom_call.1} parent=1 // pred_fallthru
      _
    %v33 = vld [vmem:[%s0] sm:$0xff]
    %v34 = vld [vmem:[%s0 + $0x8] sm:$0xff]
    %v35 = vld [vmem:[%s1] sm:$0xff]
    %v36 = vld [vmem:[%s1 + $0x8] sm:$0xff]
    %v37 = vld [vmem:[%s1 + $0x10] sm:$0xff]
    %v38 = vld [vmem:[%s1 + $0x18] sm:$0xff]
    %v39 = vld [vmem:[%s2] sm:$0x1]
    %v41 = vperm.slane %v39, 0
    %vm43 = vcmask 261120
    %v45 = vsel %vm43, %v33, 0
    %v48 = vsel %vm43, %v34, 0
    %50 = vmatpush.msra.mxu0 0.0
    %51 = vmatpush.msra.mxu0 0.0
    %52 = vmatpush.msra.mxu0 0.0
    %53 = vmatpush.msra.mxu0 0.0
    %54 = vmatpush.msra.mxu0 0.0
    %55 = vmatpush.msra.mxu0 0.0
    %56 = vmatpush.msra.mxu0 0.0
    %57 = vmatpush.msra.mxu0 0.0
    %58 = vmatpush.msra.mxu0 0.0
    %59 = vmatpush.msra.mxu0 0.0
    %60 = vmatpush.msra.mxu0 0.0
    %61 = vmatpush.msra.mxu0 0.0
    %62 = vmatpush.msra.mxu0 %v38
    %63 = vmatpush.msra.mxu0 %v37
    %64 = vmatpush.msra.mxu0 %v36
    %65 = vmatpush.msra.mxu0 %v35
    %66 = vmatmul.f32.gmra.mxu0 %v45
    %v67 = vpop.f32.mrf.mxu0
    %v68 = vadd.f32 %v41, %v67
    %69 = vmatmul.f32.gmra.mxu0 %v48
    %v70 = vpop.f32.mrf.mxu0
    %v71 = vadd.f32 %v41, %v70
    %72 = vdwg.mxu0
    %v73 = vld [vmem:[%s3] sm:$0xff]
    %v74 = vld [vmem:[%s3 + $0x8] sm:$0xff]
    %v75 = vld [vmem:[%s3 + $0x10] sm:$0xff]
    %v76 = vld [vmem:[%s3 + $0x18] sm:$0xff]
    %v77 = vld [vmem:[%s4] sm:$0x1]
    %v79 = vperm.slane %v77, 0
    %81 = vmatpush.msra.mxu0 0.0
    %82 = vmatpush.msra.mxu0 0.0
    %83 = vmatpush.msra.mxu0 0.0
    %84 = vmatpush.msra.mxu0 0.0
    %85 = vmatpush.msra.mxu0 0.0
    %86 = vmatpush.msra.mxu0 0.0
    %87 = vmatpush.msra.mxu0 0.0
    %88 = vmatpush.msra.mxu0 0.0
    %89 = vmatpush.msra.mxu0 0.0
    %90 = vmatpush.msra.mxu0 0.0
    %91 = vmatpush.msra.mxu0 0.0
    %92 = vmatpush.msra.mxu0 0.0
    %93 = vmatpush.msra.mxu0 %v76
    %94 = vmatpush.msra.mxu0 %v75
    %95 = vmatpush.msra.mxu0 %v74
    %96 = vmatpush.msra.mxu0 %v73
    %97 = vmatmul.f32.gmra.mxu0 %v45
    %v98 = vpop.f32.mrf.mxu0
    %v99 = vadd.f32 %v79, %v98
    %100 = vmatmul.f32.gmra.mxu0 %v48
    %v101 = vpop.f32.mrf.mxu0
    %v102 = vadd.f32 %v79, %v101
    %103 = vdwg.mxu0
    %v104 = vxor.u32 %v68, 2147483648
    %v105 = vxor.u32 %v71, 2147483648
    %v106 = vmul.f32 %v104, 1.442695
    %v107 = vpow.pop %v106
    %v108 = vmul.f32 %v105, 1.442695
    %v109 = vpow.pop %v108
    %v110 = vadd.f32 %v107, 1.0
    %v111 = vadd.f32 %v109, 1.0
    %v112 = vrcp.pop %v110
    %v113 = vmul.f32 %v110, %v112
    %v114 = vsub.f32 1.0, %v113
    %v115 = vmul.f32 %v112, %v114
    %v116 = vadd.f32 %v112, %v115
    %vm117 = vweird.f32 %v110
    %vm118 = vweird.f32 %v112
    %vm119 = vmor %vm117, %vm118
    %v120 = vsel %vm119, %v112, %v116
    %v121 = vand.u32 2147483647, %v110
    %vm122 = vcmp.eq.f32.partialorder %v121, 8.507059e+37
    %v123 = vand.u32 %v110, 2147483648
    %v124 = vor.u32 1.1754944e-38, %v123
    %v125 = vsel %vm122, %v124, %v120
    %v126 = vmul.f32 1.0, %v125
    %v127 = vrcp.pop %v111
    %v128 = vmul.f32 %v111, %v127
    %v129 = vsub.f32 1.0, %v128
    %v130 = vmul.f32 %v127, %v129
    %v131 = vadd.f32 %v127, %v130
    %vm132 = vweird.f32 %v111
    %vm133 = vweird.f32 %v127
    %vm134 = vmor %vm132, %vm133
    %v135 = vsel %vm134, %v127, %v131
    %v136 = vand.u32 2147483647, %v111
    %vm137 = vcmp.eq.f32.partialorder %v136, 8.507059e+37
    %v138 = vand.u32 %v111, 2147483648
    %v139 = vor.u32 1.1754944e-38, %v138
    %v140 = vsel %vm137, %v139, %v135
    %v141 = vmul.f32 1.0, %v140
    %v142 = vmul.f32 %v68, %v126
    %v143 = vmul.f32 %v71, %v141
    %v144 = vmul.f32 %v142, %v99
    %v145 = vmul.f32 %v143, %v102
    %vm146 = vcmask 523264
    %v147 = vsel %vm146, %v144, 0.0
    %148 = vadd.xlane.f32.xlu0 %v147
    %v149 = vpop.xlane.xlu0 %148
    %v150 = vsel %vm146, %v145, 0.0
    %151 = vadd.xlane.f32.xlu0 %v150
    %v152 = vpop.xlane.xlu0 %151
    %v153 = vrcp.pop 64.0
    %v154 = vmul.f32 64.0, %v153
    %v155 = vsub.f32 1.0, %v154
    %v156 = vmul.f32 %v153, %v155
    %v157 = vadd.f32 %v153, %v156
    %vm158 = vweird.f32 %v153
    %v159 = vsel %vm158, %v153, %v157
    %v160 = vmul.f32 %v149, %v159
    %v161 = vmul.f32 %v152, %v159
    %v162 = vsub.f32 %v144, %v160
    %v163 = vsub.f32 %v145, %v161
    %v164 = vmul.f32 %v162, %v162
    %v165 = vmul.f32 %v163, %v163
    %v166 = vsel %vm146, %v164, 0.0
    %167 = vadd.xlane.f32.xlu0 %v166
    %v168 = vpop.xlane.xlu0 %167
    %v169 = vsel %vm146, %v165, 0.0
    %170 = vadd.xlane.f32.xlu0 %v169
    %v171 = vpop.xlane.xlu0 %170
    %v172 = vmul.f32 %v168, %v159
    %v173 = vmul.f32 %v171, %v159
    %v174 = vadd.f32 %v172, 1e-05
    %v175 = vadd.f32 %v173, 1e-05
    %v176 = vrsqrt.pop %v174
    %v177 = vmul.f32 %v176, %v174
    %v178 = vmul.f32 %v177, %v176
    %v179 = vmul.f32 0.5, %v178
    %v180 = vsub.f32 1.5, %v179
    %v181 = vmul.f32 %v176, %v180
    %vm182 = vweird.f32 %v174
    %vm183 = vweird.f32 %v176
    %vm184 = vmor %vm182, %vm183
    %v185 = vsel %vm184, %v176, %v181
    %v186 = vrsqrt.pop %v175
    %v187 = vmul.f32 %v186, %v175
    %v188 = vmul.f32 %v187, %v186
    %v189 = vmul.f32 0.5, %v188
    %v190 = vsub.f32 1.5, %v189
    %v191 = vmul.f32 %v186, %v190
    %vm192 = vweird.f32 %v175
    %vm193 = vweird.f32 %v186
    %vm194 = vmor %vm192, %vm193
    %v195 = vsel %vm194, %v186, %v191
    %v196 = vmul.f32 %v162, %v185
    %v197 = vmul.f32 %v163, %v195
    %v198 = vld [vmem:[%s5] sm:$0x1]
    %v200 = vperm.slane %v198, 0
    %v202 = vmul.f32 %v196, %v200
    %v203 = vmul.f32 %v197, %v200
    %v204 = vld [vmem:[%s6] sm:$0x1]
    %v206 = vperm.slane %v204, 0
    %v208 = vadd.f32 %v202, %v206
    %v209 = vadd.f32 %v203, %v206
    %v210 = vld [vmem:[%s7] sm:$0xff]
    %v211 = vld [vmem:[%s7 + $0x8] sm:$0xff]
    %v212 = vld [vmem:[%s7 + $0x10] sm:$0xff]
    %v213 = vld [vmem:[%s7 + $0x18] sm:$0xff]
    %v214 = vld [vmem:[%s7 + $0x20] sm:$0xff]
    %v215 = vld [vmem:[%s7 + $0x28] sm:$0xff]
    %v216 = vld [vmem:[%s7 + $0x30] sm:$0xff]
    %v217 = vld [vmem:[%s7 + $0x38] sm:$0xff]
    %v218 = vld [vmem:[%s8] sm:$0x1]
    %v220 = vperm.slane %v218, 0
    %v223 = vsel %vm146, %v208, 0
    %v226 = vsel %vm146, %v209, 0
    %228 = vmatpush.msra.mxu0 0.0
    %229 = vmatpush.msra.mxu0 0.0
    %230 = vmatpush.msra.mxu0 0.0
    %231 = vmatpush.msra.mxu0 0.0
    %232 = vmatpush.msra.mxu0 0.0
    %233 = vmatpush.msra.mxu0 0.0
    %234 = vmatpush.msra.mxu0 0.0
    %235 = vmatpush.msra.mxu0 0.0
    %236 = vmatpush.msra.mxu0 %v217
    %237 = vmatpush.msra.mxu0 %v216
    %238 = vmatpush.msra.mxu0 %v215
    %239 = vmatpush.msra.mxu0 %v214
    %240 = vmatpush.msra.mxu0 %v213
    %241 = vmatpush.msra.mxu0 %v212
    %242 = vmatpush.msra.mxu0 %v211
    %243 = vmatpush.msra.mxu0 %v210
    %244 = vmatmul.f32.gmra.mxu0 %v223
    %v245 = vpop.f32.mrf.mxu0
    %v246 = vadd.f32 %v220, %v245
    %247 = vmatmul.f32.gmra.mxu0 %v226
    %v248 = vpop.f32.mrf.mxu0
    %v249 = vadd.f32 %v220, %v248
    %250 = vdwg.mxu0
    %251 = vst.msk [vmem:[#allocation2] sm:$0xff] %vm43, %v246
    %252 = vst.msk [vmem:[#allocation2 + $0x8] sm:$0xff] %vm43, %v249
    // Predicated region
    $region38: #{tpu_custom_call.1} parent=1 // pred_check
      _
    $region39: #{tpu_custom_call.1} parent=1 // pred_check_branch
      %254 = sbr.rel (0) target = $region41
    $region40: #{tpu_custom_call.1} parent=1 // pred_region
      %256 = vsyncadd [#allocation3], 0
      %s257 = sshll.u32 [#allocation2], 4
      %s258 = int_to_ptr.vmem [resolvable:$true] %s257
      %s259 = sshll.u32 %s9, 4
      %s260 = int_to_ptr.hbm [resolvable:$true] %s259
      %265 = dma.vmem_to_hbm [thread:$0]  %s258, 256, %s260, [#allocation3], 128, 128, 8
    $region41: #{tpu_custom_call.1} parent=1 // pred_fallthru
      _
    // Predicated region
    $region42: #{tpu_custom_call.1} parent=1 // pred_check
      _
    $region43: #{tpu_custom_call.1} parent=1 // pred_check_branch
      %267 = sbr.rel (0) target = $region45
    $region44: #{tpu_custom_call.1} parent=1 // pred_region
      %269 = dma.done [#allocation3], 256
    $region45: #{tpu_custom_call.1} parent=1 // pred_fallthru
      _
    %270 = vsyncpa [#allocation3], 1

</llo_original>
